<compile_context>
chip_gen: v6e
topology: v6e:2x2x1
jax: 0.10.0
libtpu: 0.0.40
codegen_flags: <defaults>
</compile_context>

<pallas_src>
import functools

import jax
import jax.numpy as jnp
from jax.experimental import pallas as pl
from jax.experimental.pallas import tpu as pltpu


def _gather_kernel(rows_per_step, vocab_size,
                   idx_ref, table_ref, out_ref, sem_ref):
    # idx_ref:   (N_pad,) int32   SMEM  (scalar prefetch)
    # table_ref: (V, D)   f32     HBM   (pl.ANY, manual DMA source)
    # out_ref:   (R, D)   f32     VMEM  (pipelined output block, DMA target)
    # sem_ref:   (R,)     DMA semaphores
    base = pl.program_id(0) * rows_per_step

    # Issue all row DMAs first (concurrent, hides per-row HBM latency),
    # then wait on all of them.  rows_per_step is a small static constant,
    # so these loops are fully unrolled at trace time.
    copies = []
    for r in range(rows_per_step):
        row = idx_ref[base + r]
        # Clamp to valid range (matches jnp gather; torch would raise).
        row = jnp.minimum(jnp.maximum(row, 0), vocab_size - 1)
        cp = pltpu.make_async_copy(
            table_ref.at[row], out_ref.at[r], sem_ref.at[r]
        )
        cp.start()
        copies.append(cp)
    for cp in copies:
        cp.wait()


def embedding_forward(x, table, *, rows_per_step=8):
    """x: int (batch, seq); table: float32 (V, D) -> (batch, seq, D)."""
    batch, seq = x.shape
    v, d = table.shape
    n = batch * seq

    idx = x.reshape(n).astype(jnp.int32)

    # Pad row count to a multiple of rows_per_step (padded rows use index 0
    # and are sliced off afterwards).
    n_pad = pl.cdiv(n, rows_per_step) * rows_per_step
    if n_pad != n:
        idx = jnp.pad(idx, (0, n_pad - n))

    kernel = functools.partial(_gather_kernel, rows_per_step, v)

    out = pl.pallas_call(
        kernel,
        out_shape=jax.ShapeDtypeStruct((n_pad, d), table.dtype),
        grid_spec=pltpu.PrefetchScalarGridSpec(
            num_scalar_prefetch=1,                     # indices -> SMEM
            grid=(n_pad // rows_per_step,),
            in_specs=[
                pl.BlockSpec(memory_space=pl.ANY),     # table stays in HBM
            ],
            out_specs=pl.BlockSpec(
                (rows_per_step, d), lambda i, idx: (i, 0)
            ),
            scratch_shapes=[
                pltpu.SemaphoreType.DMA((rows_per_step,)),
            ],
        ),
        compiler_params=pltpu.CompilerParams(
            dimension_semantics=("parallel",),         # v7x: split rows over 2 TCs
        ),
    )(idx, table)

    return out[:n].reshape(batch, seq, d)


if __name__ == "__main__":
    # Module hyperparameters (small, consistent with the forward pass).
    num_embeddings = 64
    embedding_dim = 128
    batch, seq = 2, 8

    key = jax.random.PRNGKey(0)
    k_table, k_idx = jax.random.split(key)

    # Deterministic parameter init (nn.Embedding default init is N(0, 1)).
    table = jax.random.normal(
        k_table, (num_embeddings, embedding_dim), dtype=jnp.float32
    )

    # Deterministic integer index input.
    x = jax.random.randint(
        k_idx, (batch, seq), 0, num_embeddings, dtype=jnp.int32
    )

    out = embedding_forward(x, table)
    out = jax.block_until_ready(out)

    # Correctness check against plain-JAX gather (== torch embedding lookup).
    ref = table[x]
    assert out.shape == (batch, seq, embedding_dim)
    assert jnp.allclose(out, ref, atol=1e-6), "mismatch vs reference gather"

    print("KERNEL_OK")
</pallas_src>

<mosaic_0001>
module attributes {stable_mosaic.version = 11 : i64} {
  func.func @_gather_kernel(%arg0: i32, %arg1: memref<16xi32, #tpu.memory_space<smem>>, %arg2: memref<64x128xf32, #tpu.memory_space<any>>, %arg3: memref<8x128xf32, #tpu.memory_space<vmem>>, %arg4: memref<8x!tpu.dma_semaphore, #tpu.memory_space<semaphore_mem>>) attributes {dimension_semantics = [#tpu.dimension_semantics<parallel>], iteration_bounds = array<i64: 2>, scalar_prefetch = 1 : i64, scratch_operands = 1 : i64, tpu.core_type = #tpu.core_type<tc>, window_params = [{}, {transform_indices = @transform_1, window_bounds = array<i64: 8, 128>}]} {
    %c8_i32 = arith.constant 8 : i32
    %0 = arith.muli %arg0, %c8_i32 : i32
    %c0_i32 = arith.constant 0 : i32
    %1 = arith.addi %0, %c0_i32 : i32
    %2 = arith.index_cast %1 : i32 to index
    %3 = memref.load %arg1[%2] : memref<16xi32, #tpu.memory_space<smem>>
    %c0_i32_0 = arith.constant 0 : i32
    %4 = arith.maxsi %3, %c0_i32_0 : i32
    %c63_i32 = arith.constant 63 : i32
    %5 = arith.minsi %4, %c63_i32 : i32
    %c0_i32_1 = arith.constant 0 : i32
    %c0_i32_2 = arith.constant 0 : i32
    %c0_i32_3 = arith.constant 0 : i32
    %6 = tpu.memref_slice %arg2[%5, %c0_i32_3] : memref<64x128xf32, #tpu.memory_space<any>> -> memref<1x128xf32, #tpu.memory_space<any>>
    %7 = tpu.memref_squeeze %6 : memref<1x128xf32, #tpu.memory_space<any>> -> memref<128xf32, #tpu.memory_space<any>>
    %c0_i32_4 = arith.constant 0 : i32
    %8 = tpu.memref_slice %arg3[%c0_i32_1, %c0_i32_4] : memref<8x128xf32, #tpu.memory_space<vmem>> -> memref<1x128xf32, #tpu.memory_space<vmem>>
    %9 = tpu.memref_squeeze %8 : memref<1x128xf32, #tpu.memory_space<vmem>> -> memref<128xf32, #tpu.memory_space<vmem>>
    %10 = tpu.memref_slice %arg4[%c0_i32_2] : memref<8x!tpu.dma_semaphore, #tpu.memory_space<semaphore_mem>> -> memref<1x!tpu.dma_semaphore, #tpu.memory_space<semaphore_mem>>
    %11 = tpu.memref_squeeze %10 : memref<1x!tpu.dma_semaphore, #tpu.memory_space<semaphore_mem>> -> memref<!tpu.dma_semaphore, #tpu.memory_space<semaphore_mem>>
    tpu.enqueue_dma source(%7 : memref<128xf32, #tpu.memory_space<any>>) target(%9 : memref<128xf32, #tpu.memory_space<vmem>>) target_semaphore(%11 : memref<!tpu.dma_semaphore, #tpu.memory_space<semaphore_mem>>)
    %c1_i32 = arith.constant 1 : i32
    %12 = arith.addi %0, %c1_i32 : i32
    %13 = arith.index_cast %12 : i32 to index
    %14 = memref.load %arg1[%13] : memref<16xi32, #tpu.memory_space<smem>>
    %c0_i32_5 = arith.constant 0 : i32
    %15 = arith.maxsi %14, %c0_i32_5 : i32
    %c63_i32_6 = arith.constant 63 : i32
    %16 = arith.minsi %15, %c63_i32_6 : i32
    %c1_i32_7 = arith.constant 1 : i32
    %c1_i32_8 = arith.constant 1 : i32
    %c0_i32_9 = arith.constant 0 : i32
    %17 = tpu.memref_slice %arg2[%16, %c0_i32_9] : memref<64x128xf32, #tpu.memory_space<any>> -> memref<1x128xf32, #tpu.memory_space<any>>
    %18 = tpu.memref_squeeze %17 : memref<1x128xf32, #tpu.memory_space<any>> -> memref<128xf32, #tpu.memory_space<any>>
    %c0_i32_10 = arith.constant 0 : i32
    %19 = tpu.memref_slice %arg3[%c1_i32_7, %c0_i32_10] : memref<8x128xf32, #tpu.memory_space<vmem>> -> memref<1x128xf32, #tpu.memory_space<vmem>>
    %20 = tpu.memref_squeeze %19 : memref<1x128xf32, #tpu.memory_space<vmem>> -> memref<128xf32, #tpu.memory_space<vmem>>
    %21 = tpu.memref_slice %arg4[%c1_i32_8] : memref<8x!tpu.dma_semaphore, #tpu.memory_space<semaphore_mem>> -> memref<1x!tpu.dma_semaphore, #tpu.memory_space<semaphore_mem>>
    %22 = tpu.memref_squeeze %21 : memref<1x!tpu.dma_semaphore, #tpu.memory_space<semaphore_mem>> -> memref<!tpu.dma_semaphore, #tpu.memory_space<semaphore_mem>>
    tpu.enqueue_dma source(%18 : memref<128xf32, #tpu.memory_space<any>>) target(%20 : memref<128xf32, #tpu.memory_space<vmem>>) target_semaphore(%22 : memref<!tpu.dma_semaphore, #tpu.memory_space<semaphore_mem>>)
    %c2_i32 = arith.constant 2 : i32
    %23 = arith.addi %0, %c2_i32 : i32
    %24 = arith.index_cast %23 : i32 to index
    %25 = memref.load %arg1[%24] : memref<16xi32, #tpu.memory_space<smem>>
    %c0_i32_11 = arith.constant 0 : i32
    %26 = arith.maxsi %25, %c0_i32_11 : i32
    %c63_i32_12 = arith.constant 63 : i32
    %27 = arith.minsi %26, %c63_i32_12 : i32
    %c2_i32_13 = arith.constant 2 : i32
    %c2_i32_14 = arith.constant 2 : i32
    %c0_i32_15 = arith.constant 0 : i32
    %28 = tpu.memref_slice %arg2[%27, %c0_i32_15] : memref<64x128xf32, #tpu.memory_space<any>> -> memref<1x128xf32, #tpu.memory_space<any>>
    %29 = tpu.memref_squeeze %28 : memref<1x128xf32, #tpu.memory_space<any>> -> memref<128xf32, #tpu.memory_space<any>>
    %c0_i32_16 = arith.constant 0 : i32
    %30 = tpu.memref_slice %arg3[%c2_i32_13, %c0_i32_16] : memref<8x128xf32, #tpu.memory_space<vmem>> -> memref<1x128xf32, #tpu.memory_space<vmem>>
    %31 = tpu.memref_squeeze %30 : memref<1x128xf32, #tpu.memory_space<vmem>> -> memref<128xf32, #tpu.memory_space<vmem>>
    %32 = tpu.memref_slice %arg4[%c2_i32_14] : memref<8x!tpu.dma_semaphore, #tpu.memory_space<semaphore_mem>> -> memref<1x!tpu.dma_semaphore, #tpu.memory_space<semaphore_mem>>
    %33 = tpu.memref_squeeze %32 : memref<1x!tpu.dma_semaphore, #tpu.memory_space<semaphore_mem>> -> memref<!tpu.dma_semaphore, #tpu.memory_space<semaphore_mem>>
    tpu.enqueue_dma source(%29 : memref<128xf32, #tpu.memory_space<any>>) target(%31 : memref<128xf32, #tpu.memory_space<vmem>>) target_semaphore(%33 : memref<!tpu.dma_semaphore, #tpu.memory_space<semaphore_mem>>)
    %c3_i32 = arith.constant 3 : i32
    %34 = arith.addi %0, %c3_i32 : i32
    %35 = arith.index_cast %34 : i32 to index
    %36 = memref.load %arg1[%35] : memref<16xi32, #tpu.memory_space<smem>>
    %c0_i32_17 = arith.constant 0 : i32
    %37 = arith.maxsi %36, %c0_i32_17 : i32
    %c63_i32_18 = arith.constant 63 : i32
    %38 = arith.minsi %37, %c63_i32_18 : i32
    %c3_i32_19 = arith.constant 3 : i32
    %c3_i32_20 = arith.constant 3 : i32
    %c0_i32_21 = arith.constant 0 : i32
    %39 = tpu.memref_slice %arg2[%38, %c0_i32_21] : memref<64x128xf32, #tpu.memory_space<any>> -> memref<1x128xf32, #tpu.memory_space<any>>
    %40 = tpu.memref_squeeze %39 : memref<1x128xf32, #tpu.memory_space<any>> -> memref<128xf32, #tpu.memory_space<any>>
    %c0_i32_22 = arith.constant 0 : i32
    %41 = tpu.memref_slice %arg3[%c3_i32_19, %c0_i32_22] : memref<8x128xf32, #tpu.memory_space<vmem>> -> memref<1x128xf32, #tpu.memory_space<vmem>>
    %42 = tpu.memref_squeeze %41 : memref<1x128xf32, #tpu.memory_space<vmem>> -> memref<128xf32, #tpu.memory_space<vmem>>
    %43 = tpu.memref_slice %arg4[%c3_i32_20] : memref<8x!tpu.dma_semaphore, #tpu.memory_space<semaphore_mem>> -> memref<1x!tpu.dma_semaphore, #tpu.memory_space<semaphore_mem>>
    %44 = tpu.memref_squeeze %43 : memref<1x!tpu.dma_semaphore, #tpu.memory_space<semaphore_mem>> -> memref<!tpu.dma_semaphore, #tpu.memory_space<semaphore_mem>>
    tpu.enqueue_dma source(%40 : memref<128xf32, #tpu.memory_space<any>>) target(%42 : memref<128xf32, #tpu.memory_space<vmem>>) target_semaphore(%44 : memref<!tpu.dma_semaphore, #tpu.memory_space<semaphore_mem>>)
    %c4_i32 = arith.constant 4 : i32
    %45 = arith.addi %0, %c4_i32 : i32
    %46 = arith.index_cast %45 : i32 to index
    %47 = memref.load %arg1[%46] : memref<16xi32, #tpu.memory_space<smem>>
    %c0_i32_23 = arith.constant 0 : i32
    %48 = arith.maxsi %47, %c0_i32_23 : i32
    %c63_i32_24 = arith.constant 63 : i32
    %49 = arith.minsi %48, %c63_i32_24 : i32
    %c4_i32_25 = arith.constant 4 : i32
    %c4_i32_26 = arith.constant 4 : i32
    %c0_i32_27 = arith.constant 0 : i32
    %50 = tpu.memref_slice %arg2[%49, %c0_i32_27] : memref<64x128xf32, #tpu.memory_space<any>> -> memref<1x128xf32, #tpu.memory_space<any>>
    %51 = tpu.memref_squeeze %50 : memref<1x128xf32, #tpu.memory_space<any>> -> memref<128xf32, #tpu.memory_space<any>>
    %c0_i32_28 = arith.constant 0 : i32
    %52 = tpu.memref_slice %arg3[%c4_i32_25, %c0_i32_28] : memref<8x128xf32, #tpu.memory_space<vmem>> -> memref<1x128xf32, #tpu.memory_space<vmem>>
    %53 = tpu.memref_squeeze %52 : memref<1x128xf32, #tpu.memory_space<vmem>> -> memref<128xf32, #tpu.memory_space<vmem>>
    %54 = tpu.memref_slice %arg4[%c4_i32_26] : memref<8x!tpu.dma_semaphore, #tpu.memory_space<semaphore_mem>> -> memref<1x!tpu.dma_semaphore, #tpu.memory_space<semaphore_mem>>
    %55 = tpu.memref_squeeze %54 : memref<1x!tpu.dma_semaphore, #tpu.memory_space<semaphore_mem>> -> memref<!tpu.dma_semaphore, #tpu.memory_space<semaphore_mem>>
    tpu.enqueue_dma source(%51 : memref<128xf32, #tpu.memory_space<any>>) target(%53 : memref<128xf32, #tpu.memory_space<vmem>>) target_semaphore(%55 : memref<!tpu.dma_semaphore, #tpu.memory_space<semaphore_mem>>)
    %c5_i32 = arith.constant 5 : i32
    %56 = arith.addi %0, %c5_i32 : i32
    %57 = arith.index_cast %56 : i32 to index
    %58 = memref.load %arg1[%57] : memref<16xi32, #tpu.memory_space<smem>>
    %c0_i32_29 = arith.constant 0 : i32
    %59 = arith.maxsi %58, %c0_i32_29 : i32
    %c63_i32_30 = arith.constant 63 : i32
    %60 = arith.minsi %59, %c63_i32_30 : i32
    %c5_i32_31 = arith.constant 5 : i32
    %c5_i32_32 = arith.constant 5 : i32
    %c0_i32_33 = arith.constant 0 : i32
    %61 = tpu.memref_slice %arg2[%60, %c0_i32_33] : memref<64x128xf32, #tpu.memory_space<any>> -> memref<1x128xf32, #tpu.memory_space<any>>
    %62 = tpu.memref_squeeze %61 : memref<1x128xf32, #tpu.memory_space<any>> -> memref<128xf32, #tpu.memory_space<any>>
    %c0_i32_34 = arith.constant 0 : i32
    %63 = tpu.memref_slice %arg3[%c5_i32_31, %c0_i32_34] : memref<8x128xf32, #tpu.memory_space<vmem>> -> memref<1x128xf32, #tpu.memory_space<vmem>>
    %64 = tpu.memref_squeeze %63 : memref<1x128xf32, #tpu.memory_space<vmem>> -> memref<128xf32, #tpu.memory_space<vmem>>
    %65 = tpu.memref_slice %arg4[%c5_i32_32] : memref<8x!tpu.dma_semaphore, #tpu.memory_space<semaphore_mem>> -> memref<1x!tpu.dma_semaphore, #tpu.memory_space<semaphore_mem>>
    %66 = tpu.memref_squeeze %65 : memref<1x!tpu.dma_semaphore, #tpu.memory_space<semaphore_mem>> -> memref<!tpu.dma_semaphore, #tpu.memory_space<semaphore_mem>>
    tpu.enqueue_dma source(%62 : memref<128xf32, #tpu.memory_space<any>>) target(%64 : memref<128xf32, #tpu.memory_space<vmem>>) target_semaphore(%66 : memref<!tpu.dma_semaphore, #tpu.memory_space<semaphore_mem>>)
    %c6_i32 = arith.constant 6 : i32
    %67 = arith.addi %0, %c6_i32 : i32
    %68 = arith.index_cast %67 : i32 to index
    %69 = memref.load %arg1[%68] : memref<16xi32, #tpu.memory_space<smem>>
    %c0_i32_35 = arith.constant 0 : i32
    %70 = arith.maxsi %69, %c0_i32_35 : i32
    %c63_i32_36 = arith.constant 63 : i32
    %71 = arith.minsi %70, %c63_i32_36 : i32
    %c6_i32_37 = arith.constant 6 : i32
    %c6_i32_38 = arith.constant 6 : i32
    %c0_i32_39 = arith.constant 0 : i32
    %72 = tpu.memref_slice %arg2[%71, %c0_i32_39] : memref<64x128xf32, #tpu.memory_space<any>> -> memref<1x128xf32, #tpu.memory_space<any>>
    %73 = tpu.memref_squeeze %72 : memref<1x128xf32, #tpu.memory_space<any>> -> memref<128xf32, #tpu.memory_space<any>>
    %c0_i32_40 = arith.constant 0 : i32
    %74 = tpu.memref_slice %arg3[%c6_i32_37, %c0_i32_40] : memref<8x128xf32, #tpu.memory_space<vmem>> -> memref<1x128xf32, #tpu.memory_space<vmem>>
    %75 = tpu.memref_squeeze %74 : memref<1x128xf32, #tpu.memory_space<vmem>> -> memref<128xf32, #tpu.memory_space<vmem>>
    %76 = tpu.memref_slice %arg4[%c6_i32_38] : memref<8x!tpu.dma_semaphore, #tpu.memory_space<semaphore_mem>> -> memref<1x!tpu.dma_semaphore, #tpu.memory_space<semaphore_mem>>
    %77 = tpu.memref_squeeze %76 : memref<1x!tpu.dma_semaphore, #tpu.memory_space<semaphore_mem>> -> memref<!tpu.dma_semaphore, #tpu.memory_space<semaphore_mem>>
    tpu.enqueue_dma source(%73 : memref<128xf32, #tpu.memory_space<any>>) target(%75 : memref<128xf32, #tpu.memory_space<vmem>>) target_semaphore(%77 : memref<!tpu.dma_semaphore, #tpu.memory_space<semaphore_mem>>)
    %c7_i32 = arith.constant 7 : i32
    %78 = arith.addi %0, %c7_i32 : i32
    %79 = arith.index_cast %78 : i32 to index
    %80 = memref.load %arg1[%79] : memref<16xi32, #tpu.memory_space<smem>>
    %c0_i32_41 = arith.constant 0 : i32
    %81 = arith.maxsi %80, %c0_i32_41 : i32
    %c63_i32_42 = arith.constant 63 : i32
    %82 = arith.minsi %81, %c63_i32_42 : i32
    %c7_i32_43 = arith.constant 7 : i32
    %c7_i32_44 = arith.constant 7 : i32
    %c0_i32_45 = arith.constant 0 : i32
    %83 = tpu.memref_slice %arg2[%82, %c0_i32_45] : memref<64x128xf32, #tpu.memory_space<any>> -> memref<1x128xf32, #tpu.memory_space<any>>
    %84 = tpu.memref_squeeze %83 : memref<1x128xf32, #tpu.memory_space<any>> -> memref<128xf32, #tpu.memory_space<any>>
    %c0_i32_46 = arith.constant 0 : i32
    %85 = tpu.memref_slice %arg3[%c7_i32_43, %c0_i32_46] : memref<8x128xf32, #tpu.memory_space<vmem>> -> memref<1x128xf32, #tpu.memory_space<vmem>>
    %86 = tpu.memref_squeeze %85 : memref<1x128xf32, #tpu.memory_space<vmem>> -> memref<128xf32, #tpu.memory_space<vmem>>
    %87 = tpu.memref_slice %arg4[%c7_i32_44] : memref<8x!tpu.dma_semaphore, #tpu.memory_space<semaphore_mem>> -> memref<1x!tpu.dma_semaphore, #tpu.memory_space<semaphore_mem>>
    %88 = tpu.memref_squeeze %87 : memref<1x!tpu.dma_semaphore, #tpu.memory_space<semaphore_mem>> -> memref<!tpu.dma_semaphore, #tpu.memory_space<semaphore_mem>>
    tpu.enqueue_dma source(%84 : memref<128xf32, #tpu.memory_space<any>>) target(%86 : memref<128xf32, #tpu.memory_space<vmem>>) target_semaphore(%88 : memref<!tpu.dma_semaphore, #tpu.memory_space<semaphore_mem>>)
    %c0_i32_47 = arith.constant 0 : i32
    %c0_i32_48 = arith.constant 0 : i32
    %c0_i32_49 = arith.constant 0 : i32
    %89 = tpu.memref_slice %arg2[%5, %c0_i32_49] : memref<64x128xf32, #tpu.memory_space<any>> -> memref<1x128xf32, #tpu.memory_space<any>>
    %90 = tpu.memref_squeeze %89 : memref<1x128xf32, #tpu.memory_space<any>> -> memref<128xf32, #tpu.memory_space<any>>
    %c0_i32_50 = arith.constant 0 : i32
    %91 = tpu.memref_slice %arg3[%c0_i32_47, %c0_i32_50] : memref<8x128xf32, #tpu.memory_space<vmem>> -> memref<1x128xf32, #tpu.memory_space<vmem>>
    %92 = tpu.memref_squeeze %91 : memref<1x128xf32, #tpu.memory_space<vmem>> -> memref<128xf32, #tpu.memory_space<vmem>>
    %93 = tpu.memref_slice %arg4[%c0_i32_48] : memref<8x!tpu.dma_semaphore, #tpu.memory_space<semaphore_mem>> -> memref<1x!tpu.dma_semaphore, #tpu.memory_space<semaphore_mem>>
    %94 = tpu.memref_squeeze %93 : memref<1x!tpu.dma_semaphore, #tpu.memory_space<semaphore_mem>> -> memref<!tpu.dma_semaphore, #tpu.memory_space<semaphore_mem>>
    tpu.wait_dma2 semaphore(%94 : memref<!tpu.dma_semaphore, #tpu.memory_space<semaphore_mem>>) src(%90 : memref<128xf32, #tpu.memory_space<any>>) dst(%92 : memref<128xf32, #tpu.memory_space<vmem>>)
    %c1_i32_51 = arith.constant 1 : i32
    %c1_i32_52 = arith.constant 1 : i32
    %c0_i32_53 = arith.constant 0 : i32
    %95 = tpu.memref_slice %arg2[%16, %c0_i32_53] : memref<64x128xf32, #tpu.memory_space<any>> -> memref<1x128xf32, #tpu.memory_space<any>>
    %96 = tpu.memref_squeeze %95 : memref<1x128xf32, #tpu.memory_space<any>> -> memref<128xf32, #tpu.memory_space<any>>
    %c0_i32_54 = arith.constant 0 : i32
    %97 = tpu.memref_slice %arg3[%c1_i32_51, %c0_i32_54] : memref<8x128xf32, #tpu.memory_space<vmem>> -> memref<1x128xf32, #tpu.memory_space<vmem>>
    %98 = tpu.memref_squeeze %97 : memref<1x128xf32, #tpu.memory_space<vmem>> -> memref<128xf32, #tpu.memory_space<vmem>>
    %99 = tpu.memref_slice %arg4[%c1_i32_52] : memref<8x!tpu.dma_semaphore, #tpu.memory_space<semaphore_mem>> -> memref<1x!tpu.dma_semaphore, #tpu.memory_space<semaphore_mem>>
    %100 = tpu.memref_squeeze %99 : memref<1x!tpu.dma_semaphore, #tpu.memory_space<semaphore_mem>> -> memref<!tpu.dma_semaphore, #tpu.memory_space<semaphore_mem>>
    tpu.wait_dma2 semaphore(%100 : memref<!tpu.dma_semaphore, #tpu.memory_space<semaphore_mem>>) src(%96 : memref<128xf32, #tpu.memory_space<any>>) dst(%98 : memref<128xf32, #tpu.memory_space<vmem>>)
    %c2_i32_55 = arith.constant 2 : i32
    %c2_i32_56 = arith.constant 2 : i32
    %c0_i32_57 = arith.constant 0 : i32
    %101 = tpu.memref_slice %arg2[%27, %c0_i32_57] : memref<64x128xf32, #tpu.memory_space<any>> -> memref<1x128xf32, #tpu.memory_space<any>>
    %102 = tpu.memref_squeeze %101 : memref<1x128xf32, #tpu.memory_space<any>> -> memref<128xf32, #tpu.memory_space<any>>
    %c0_i32_58 = arith.constant 0 : i32
    %103 = tpu.memref_slice %arg3[%c2_i32_55, %c0_i32_58] : memref<8x128xf32, #tpu.memory_space<vmem>> -> memref<1x128xf32, #tpu.memory_space<vmem>>
    %104 = tpu.memref_squeeze %103 : memref<1x128xf32, #tpu.memory_space<vmem>> -> memref<128xf32, #tpu.memory_space<vmem>>
    %105 = tpu.memref_slice %arg4[%c2_i32_56] : memref<8x!tpu.dma_semaphore, #tpu.memory_space<semaphore_mem>> -> memref<1x!tpu.dma_semaphore, #tpu.memory_space<semaphore_mem>>
    %106 = tpu.memref_squeeze %105 : memref<1x!tpu.dma_semaphore, #tpu.memory_space<semaphore_mem>> -> memref<!tpu.dma_semaphore, #tpu.memory_space<semaphore_mem>>
    tpu.wait_dma2 semaphore(%106 : memref<!tpu.dma_semaphore, #tpu.memory_space<semaphore_mem>>) src(%102 : memref<128xf32, #tpu.memory_space<any>>) dst(%104 : memref<128xf32, #tpu.memory_space<vmem>>)
    %c3_i32_59 = arith.constant 3 : i32
    %c3_i32_60 = arith.constant 3 : i32
    %c0_i32_61 = arith.constant 0 : i32
    %107 = tpu.memref_slice %arg2[%38, %c0_i32_61] : memref<64x128xf32, #tpu.memory_space<any>> -> memref<1x128xf32, #tpu.memory_space<any>>
    %108 = tpu.memref_squeeze %107 : memref<1x128xf32, #tpu.memory_space<any>> -> memref<128xf32, #tpu.memory_space<any>>
    %c0_i32_62 = arith.constant 0 : i32
    %109 = tpu.memref_slice %arg3[%c3_i32_59, %c0_i32_62] : memref<8x128xf32, #tpu.memory_space<vmem>> -> memref<1x128xf32, #tpu.memory_space<vmem>>
    %110 = tpu.memref_squeeze %109 : memref<1x128xf32, #tpu.memory_space<vmem>> -> memref<128xf32, #tpu.memory_space<vmem>>
    %111 = tpu.memref_slice %arg4[%c3_i32_60] : memref<8x!tpu.dma_semaphore, #tpu.memory_space<semaphore_mem>> -> memref<1x!tpu.dma_semaphore, #tpu.memory_space<semaphore_mem>>
    %112 = tpu.memref_squeeze %111 : memref<1x!tpu.dma_semaphore, #tpu.memory_space<semaphore_mem>> -> memref<!tpu.dma_semaphore, #tpu.memory_space<semaphore_mem>>
    tpu.wait_dma2 semaphore(%112 : memref<!tpu.dma_semaphore, #tpu.memory_space<semaphore_mem>>) src(%108 : memref<128xf32, #tpu.memory_space<any>>) dst(%110 : memref<128xf32, #tpu.memory_space<vmem>>)
    %c4_i32_63 = arith.constant 4 : i32
    %c4_i32_64 = arith.constant 4 : i32
    %c0_i32_65 = arith.constant 0 : i32
    %113 = tpu.memref_slice %arg2[%49, %c0_i32_65] : memref<64x128xf32, #tpu.memory_space<any>> -> memref<1x128xf32, #tpu.memory_space<any>>
    %114 = tpu.memref_squeeze %113 : memref<1x128xf32, #tpu.memory_space<any>> -> memref<128xf32, #tpu.memory_space<any>>
    %c0_i32_66 = arith.constant 0 : i32
    %115 = tpu.memref_slice %arg3[%c4_i32_63, %c0_i32_66] : memref<8x128xf32, #tpu.memory_space<vmem>> -> memref<1x128xf32, #tpu.memory_space<vmem>>
    %116 = tpu.memref_squeeze %115 : memref<1x128xf32, #tpu.memory_space<vmem>> -> memref<128xf32, #tpu.memory_space<vmem>>
    %117 = tpu.memref_slice %arg4[%c4_i32_64] : memref<8x!tpu.dma_semaphore, #tpu.memory_space<semaphore_mem>> -> memref<1x!tpu.dma_semaphore, #tpu.memory_space<semaphore_mem>>
    %118 = tpu.memref_squeeze %117 : memref<1x!tpu.dma_semaphore, #tpu.memory_space<semaphore_mem>> -> memref<!tpu.dma_semaphore, #tpu.memory_space<semaphore_mem>>
    tpu.wait_dma2 semaphore(%118 : memref<!tpu.dma_semaphore, #tpu.memory_space<semaphore_mem>>) src(%114 : memref<128xf32, #tpu.memory_space<any>>) dst(%116 : memref<128xf32, #tpu.memory_space<vmem>>)
    %c5_i32_67 = arith.constant 5 : i32
    %c5_i32_68 = arith.constant 5 : i32
    %c0_i32_69 = arith.constant 0 : i32
    %119 = tpu.memref_slice %arg2[%60, %c0_i32_69] : memref<64x128xf32, #tpu.memory_space<any>> -> memref<1x128xf32, #tpu.memory_space<any>>
    %120 = tpu.memref_squeeze %119 : memref<1x128xf32, #tpu.memory_space<any>> -> memref<128xf32, #tpu.memory_space<any>>
    %c0_i32_70 = arith.constant 0 : i32
    %121 = tpu.memref_slice %arg3[%c5_i32_67, %c0_i32_70] : memref<8x128xf32, #tpu.memory_space<vmem>> -> memref<1x128xf32, #tpu.memory_space<vmem>>
    %122 = tpu.memref_squeeze %121 : memref<1x128xf32, #tpu.memory_space<vmem>> -> memref<128xf32, #tpu.memory_space<vmem>>
    %123 = tpu.memref_slice %arg4[%c5_i32_68] : memref<8x!tpu.dma_semaphore, #tpu.memory_space<semaphore_mem>> -> memref<1x!tpu.dma_semaphore, #tpu.memory_space<semaphore_mem>>
    %124 = tpu.memref_squeeze %123 : memref<1x!tpu.dma_semaphore, #tpu.memory_space<semaphore_mem>> -> memref<!tpu.dma_semaphore, #tpu.memory_space<semaphore_mem>>
    tpu.wait_dma2 semaphore(%124 : memref<!tpu.dma_semaphore, #tpu.memory_space<semaphore_mem>>) src(%120 : memref<128xf32, #tpu.memory_space<any>>) dst(%122 : memref<128xf32, #tpu.memory_space<vmem>>)
    %c6_i32_71 = arith.constant 6 : i32
    %c6_i32_72 = arith.constant 6 : i32
    %c0_i32_73 = arith.constant 0 : i32
    %125 = tpu.memref_slice %arg2[%71, %c0_i32_73] : memref<64x128xf32, #tpu.memory_space<any>> -> memref<1x128xf32, #tpu.memory_space<any>>
    %126 = tpu.memref_squeeze %125 : memref<1x128xf32, #tpu.memory_space<any>> -> memref<128xf32, #tpu.memory_space<any>>
    %c0_i32_74 = arith.constant 0 : i32
    %127 = tpu.memref_slice %arg3[%c6_i32_71, %c0_i32_74] : memref<8x128xf32, #tpu.memory_space<vmem>> -> memref<1x128xf32, #tpu.memory_space<vmem>>
    %128 = tpu.memref_squeeze %127 : memref<1x128xf32, #tpu.memory_space<vmem>> -> memref<128xf32, #tpu.memory_space<vmem>>
    %129 = tpu.memref_slice %arg4[%c6_i32_72] : memref<8x!tpu.dma_semaphore, #tpu.memory_space<semaphore_mem>> -> memref<1x!tpu.dma_semaphore, #tpu.memory_space<semaphore_mem>>
    %130 = tpu.memref_squeeze %129 : memref<1x!tpu.dma_semaphore, #tpu.memory_space<semaphore_mem>> -> memref<!tpu.dma_semaphore, #tpu.memory_space<semaphore_mem>>
    tpu.wait_dma2 semaphore(%130 : memref<!tpu.dma_semaphore, #tpu.memory_space<semaphore_mem>>) src(%126 : memref<128xf32, #tpu.memory_space<any>>) dst(%128 : memref<128xf32, #tpu.memory_space<vmem>>)
    %c7_i32_75 = arith.constant 7 : i32
    %c7_i32_76 = arith.constant 7 : i32
    %c0_i32_77 = arith.constant 0 : i32
    %131 = tpu.memref_slice %arg2[%82, %c0_i32_77] : memref<64x128xf32, #tpu.memory_space<any>> -> memref<1x128xf32, #tpu.memory_space<any>>
    %132 = tpu.memref_squeeze %131 : memref<1x128xf32, #tpu.memory_space<any>> -> memref<128xf32, #tpu.memory_space<any>>
    %c0_i32_78 = arith.constant 0 : i32
    %133 = tpu.memref_slice %arg3[%c7_i32_75, %c0_i32_78] : memref<8x128xf32, #tpu.memory_space<vmem>> -> memref<1x128xf32, #tpu.memory_space<vmem>>
    %134 = tpu.memref_squeeze %133 : memref<1x128xf32, #tpu.memory_space<vmem>> -> memref<128xf32, #tpu.memory_space<vmem>>
    %135 = tpu.memref_slice %arg4[%c7_i32_76] : memref<8x!tpu.dma_semaphore, #tpu.memory_space<semaphore_mem>> -> memref<1x!tpu.dma_semaphore, #tpu.memory_space<semaphore_mem>>
    %136 = tpu.memref_squeeze %135 : memref<1x!tpu.dma_semaphore, #tpu.memory_space<semaphore_mem>> -> memref<!tpu.dma_semaphore, #tpu.memory_space<semaphore_mem>>
    tpu.wait_dma2 semaphore(%136 : memref<!tpu.dma_semaphore, #tpu.memory_space<semaphore_mem>>) src(%132 : memref<128xf32, #tpu.memory_space<any>>) dst(%134 : memref<128xf32, #tpu.memory_space<vmem>>)
    return
  }
  func.func @transform_1(%arg0: i32, %arg1: memref<16xi32, #tpu.memory_space<smem>>) -> (i32, i32) {
    %c0_i32 = arith.constant 0 : i32
    %c0_i32_0 = arith.constant 0 : i32
    return %arg0, %c0_i32 : i32, i32
  }
}

</mosaic_0001>

<llo_original>
// kernel: tpu_custom_call.1
$region0: #{tpu_custom_call.1}
  #allocation0 [shape = 'u32[]', space=smem, size = 0x4, offset = 0x4, fixed_abs, tag = 'smem constant byte address 0x4 - core index']
  #allocation1 [shape = 'u32[144,128]{1,0:T(1,128)}', space=vmem, size = 0x12000, scoped, tag = 'internal scratch']
  #allocation2 [shape = 's32[8]{0}', space=sflag, size = 0x20, scoped, tag = 'scratch operand']
  #allocation3 [shape = 's32[1]{0}', space=sflag, size = 0x4, scoped, tag = 'scoped memory for tpu_custom_call.1']
  #allocation4 [shape = 'u8[512]{0}', space=smem, size = 0x200, scoped, tag = 'prefetched SMEM operand 0']
  #allocation7 [shape = 's32[]', space=sflag, size = 0x4, offset = 0, fixed_abs, tag = 'sflag constant byte address 0x0 - dummy sync flag']
  #allocation8 [shape = 's32[]', space=sflag, size = 0x4, offset = 0, fixed_abs, tag = 'sflag constant byte address 0x0 - dummy sync flag']
  #allocation9 [shape = 'u32[]', space=smem, size = 0x4, offset = 0x44, fixed_abs, tag = 'smem constant byte address 0x44 - assertion arg 0']
  #allocation10 [shape = 'u32[]', space=smem, size = 0x4, offset = 0x48, fixed_abs, tag = 'smem constant byte address 0x48 - assertion arg 1']
  #allocation11 [shape = 's32[]', space=sflag, size = 0x4, offset = 0, fixed_abs, tag = 'sflag constant byte address 0x0 - dummy sync flag']
  #allocation12 [shape = 's32[]', space=sflag, size = 0x4, offset = 0, fixed_abs, tag = 'sflag constant byte address 0x0 - dummy sync flag']
  #allocation13 [shape = 's32[]', space=sflag, size = 0x4, offset = 0, fixed_abs, tag = 'sflag constant byte address 0x0 - dummy sync flag']
  #allocation14 [shape = 's32[]', space=sflag, size = 0x4, offset = 0, fixed_abs, tag = 'sflag constant byte address 0x0 - dummy sync flag']
  #allocation15 [shape = 's32[]', space=sflag, size = 0x4, offset = 0, fixed_abs, tag = 'sflag constant byte address 0x0 - dummy sync flag']
  #allocation16 [shape = 's32[]', space=sflag, size = 0x4, offset = 0, fixed_abs, tag = 'sflag constant byte address 0x0 - dummy sync flag']
  #allocation17 [shape = 's32[]', space=sflag, size = 0x4, offset = 0, fixed_abs, tag = 'sflag constant byte address 0x0 - dummy sync flag']
  #allocation18 [shape = 's32[]', space=sflag, size = 0x4, offset = 0, fixed_abs, tag = 'sflag constant byte address 0x0 - dummy sync flag']
  #allocation19 [shape = 's32[]', space=sflag, size = 0x4, offset = 0, fixed_abs, tag = 'sflag constant byte address 0x0 - dummy sync flag']
  #allocation20 [shape = 's32[]', space=sflag, size = 0x4, offset = 0, fixed_abs, tag = 'sflag constant byte address 0x0 - dummy sync flag']
  #allocation21 [shape = 's32[]', space=sflag, size = 0x4, offset = 0, fixed_abs, tag = 'sflag constant byte address 0x0 - dummy sync flag']
  #allocation22 [shape = 's32[]', space=sflag, size = 0x4, offset = 0, fixed_abs, tag = 'sflag constant byte address 0x0 - dummy sync flag']
  #allocation23 [shape = 's32[]', space=sflag, size = 0x4, offset = 0, fixed_abs, tag = 'sflag constant byte address 0x0 - dummy sync flag']
  #allocation24 [shape = 's32[]', space=sflag, size = 0x4, offset = 0, fixed_abs, tag = 'sflag constant byte address 0x0 - dummy sync flag']
  %s0 = inlined_call_operand.hbm [shape: s32[16], index: 0, kind: input, shape index: {}]
  %s1 = inlined_call_operand.hbm [shape: f32[64,128], index: 1, kind: input, shape index: {}]
  %s2 = inlined_call_operand.hbm [shape: f32[16,128], index: 2, kind: output, shape index: {}]
  %s3 = sld [smem:[#allocation0]]
  $region57: #{tpu_custom_call.1} parent=0
    _
  %s5 = ssub.s32 1, %s3
  %s6 = scalar_select 0, %s5, %s3
  %8 = dma.hbm_to_smem %s0, 16, [#allocation4], [#allocation3]
  %9 = dma.done [#allocation3], 16
  %10 = sfence
  $region1: #{tpu_custom_call.1} parent=0
    #allocation5 [shape = 'u8[8192]{0}', space=vmem, size = 0x2000, scoped, tag = 'output window, operand 0']
    #allocation6 [shape = 's32[2]{0}', space=sflag, size = 0x8, scoped, tag = 'scoped memory for tpu_custom_call.1']
    %11 = vsyncpa [#allocation6], 0
    %s12 = scalar_lea.sflag [#allocation6], 1
    %13 = vsyncpa %s12, 0
    loop: start=0, step=1, limit=3
    $region2: #{tpu_custom_call.1} parent=1 // loop_pre_header
      _
    $region3: #{tpu_custom_call.1} parent=1 // loop_header
      %s15 = sphi 0, %s19
      %p16 = scmp.ge.s32.totalorder %s15, 3
      %s24 = sphi 0, %s26
      %s27 = sphi 0, %s24
      %s37 = sphi 0, %s27
    $region4: #{tpu_custom_call.1} parent=1 // loop_header_branch
      %18 = sbr.rel (%p16) target = $region8
    $region5: #{tpu_custom_call.1} parent=1 // loop_body
      %s20 = ssub.s32 %s15, 1
      %s21 = sadd.s32 %s15, 1
      %s22 = ssub.s32 %s15, %s21
      %p23 = scmp.eq.s32.totalorder %s22, 0
      %s25 = sadd.s32 %s24, 1
      %s26 = scalar_select %p23, %s24, %s25
      %p28 = pneg %p23
      %p29 = scmp.eq.s32.totalorder %s15, 1
      %p30 = por %p28, %p29
      %p31 = scmp.ne.s32.totalorder %s24, %s27
      %p32 = scmp.eq.s32.totalorder %s15, 0
      %p33 = por %p31, %p32
      %p34 = scmp.ne.s32.totalorder %s24, %s27
      %p35 = scmp.eq.s32.totalorder %s20, 1
      %p36 = por %p34, %p35
      %p38 = scmp.ne.s32.totalorder %s27, %s37
      %p39 = scmp.eq.s32.totalorder %s20, 0
      %p40 = por %p38, %p39
      %p41 = scmp.lt.s32.totalorder %s15, 2
      // Predicated region
      $region9: #{tpu_custom_call.1} parent=5 // pred_check
        %p42 = pneg %p41
      $region10: #{tpu_custom_call.1} parent=5 // pred_check_branch
        %44 = sbr.rel (%p42) target = $region12
      $region11: #{tpu_custom_call.1} parent=5 // pred_region
        %p45 = pneg %p33
        %p46 = pneg %p30
        %s47 = sand.u32 %s24, 1
        %s48 = scalar_lea.sflag [#allocation6], %s47
        %s49 = sand.u32 %s24, 1
        %s50 = smul.addr %s49, 8
        %s51 = scalar_lea.vmem [#allocation5], %s50
        %s52 = smul.u32 %s15, 8
        %s53 = sld [smem:[#allocation4 + %s52]]
        %p54 = scmp.gt.s32.totalorder %s53, 0
        %s55 = scalar_select %p54, %s53, 0
        %p56 = scmp.lt.s32.totalorder %s55, 63
        %s57 = scalar_select %p56, %s55, 63
        %s58 = smul.addr %s57, 16
        %s59 = scalar_lea.hbm %s1, %s58
        // Predicated region
        $region13: #{tpu_custom_call.1} parent=11 // pred_check
          _
        $region14: #{tpu_custom_call.1} parent=11 // pred_check_branch
          %61 = sbr.rel target = $region16
        $region15: #{tpu_custom_call.1} parent=11 // pred_region
          %62 = sst [smem:[#allocation9]] [#allocation8]
          %63 = sst [smem:[#allocation10]] [#allocation7]
        $region16: #{tpu_custom_call.1} parent=11 // pred_fallthru
          _
        %65 = shalt.err (0)
        %s67 = sshll.u32 %s51, 4
        %s68 = int_to_ptr.vmem [resolvable:$true] %s67
        %70 = dma.hbm_to_vmem [thread:$0]  %s59, 16, %s68, [#allocation2]
        %s71 = sadd.s32 %s52, 1
        %s72 = sld [smem:[#allocation4 + %s71]]
        %p73 = scmp.gt.s32.totalorder %s72, 0
        %s74 = scalar_select %p73, %s72, 0
        %p75 = scmp.lt.s32.totalorder %s74, 63
        %s76 = scalar_select %p75, %s74, 63
        %s77 = smul.addr %s76, 16
        %s78 = scalar_lea.hbm %s1, %s77
        %s79 = scalar_lea.vmem %s51, 1 [#allocation5]
        %s80 = scalar_lea.sflag [#allocation2], 1
        // Predicated region
        $region17: #{tpu_custom_call.1} parent=11 // pred_check
          _
        $region18: #{tpu_custom_call.1} parent=11 // pred_check_branch
          %82 = sbr.rel target = $region20
        $region19: #{tpu_custom_call.1} parent=11 // pred_region
          %83 = sst [smem:[#allocation9]] [#allocation12]
          %84 = sst [smem:[#allocation10]] [#allocation11]
        $region20: #{tpu_custom_call.1} parent=11 // pred_fallthru
          _
        %86 = shalt.err (0)
        %s88 = sshll.u32 %s79, 4
        %s89 = int_to_ptr.vmem [resolvable:$true] %s88
        %91 = dma.hbm_to_vmem [thread:$0]  %s78, 16, %s89, %s80
        %s92 = sadd.s32 %s52, 2
        %s93 = sld [smem:[#allocation4 + %s92]]
        %p94 = scmp.gt.s32.totalorder %s93, 0
        %s95 = scalar_select %p94, %s93, 0
        %p96 = scmp.lt.s32.totalorder %s95, 63
        %s97 = scalar_select %p96, %s95, 63
        %s98 = smul.addr %s97, 16
        %s99 = scalar_lea.hbm %s1, %s98
        %s100 = scalar_lea.vmem %s51, 2 [#allocation5]
        %s101 = scalar_lea.sflag [#allocation2], 2
        // Predicated region
        $region21: #{tpu_custom_call.1} parent=11 // pred_check
          _
        $region22: #{tpu_custom_call.1} parent=11 // pred_check_branch
          %103 = sbr.rel target = $region24
        $region23: #{tpu_custom_call.1} parent=11 // pred_region
          %104 = sst [smem:[#allocation9]] [#allocation14]
          %105 = sst [smem:[#allocation10]] [#allocation13]
        $region24: #{tpu_custom_call.1} parent=11 // pred_fallthru
          _
        %107 = shalt.err (0)
        %s109 = sshll.u32 %s100, 4
        %s110 = int_to_ptr.vmem [resolvable:$true] %s109
        %112 = dma.hbm_to_vmem [thread:$0]  %s99, 16, %s110, %s101
        %s113 = sadd.s32 %s52, 3
        %s114 = sld [smem:[#allocation4 + %s113]]
        %p115 = scmp.gt.s32.totalorder %s114, 0
        %s116 = scalar_select %p115, %s114, 0
        %p117 = scmp.lt.s32.totalorder %s116, 63
        %s118 = scalar_select %p117, %s116, 63
        %s119 = smul.addr %s118, 16
        %s120 = scalar_lea.hbm %s1, %s119
        %s121 = scalar_lea.vmem %s51, 3 [#allocation5]
        %s122 = scalar_lea.sflag [#allocation2], 3
        // Predicated region
        $region25: #{tpu_custom_call.1} parent=11 // pred_check
          _
        $region26: #{tpu_custom_call.1} parent=11 // pred_check_branch
          %124 = sbr.rel target = $region28
        $region27: #{tpu_custom_call.1} parent=11 // pred_region
          %125 = sst [smem:[#allocation9]] [#allocation16]
          %126 = sst [smem:[#allocation10]] [#allocation15]
        $region28: #{tpu_custom_call.1} parent=11 // pred_fallthru
          _
        %128 = shalt.err (0)
        %s130 = sshll.u32 %s121, 4
        %s131 = int_to_ptr.vmem [resolvable:$true] %s130
        %133 = dma.hbm_to_vmem [thread:$0]  %s120, 16, %s131, %s122
        %s134 = sadd.s32 %s52, 4
        %s135 = sld [smem:[#allocation4 + %s134]]
        %p136 = scmp.gt.s32.totalorder %s135, 0
        %s137 = scalar_select %p136, %s135, 0
        %p138 = scmp.lt.s32.totalorder %s137, 63
        %s139 = scalar_select %p138, %s137, 63
        %s140 = smul.addr %s139, 16
        %s141 = scalar_lea.hbm %s1, %s140
        %s142 = scalar_lea.vmem %s51, 4 [#allocation5]
        %s143 = scalar_lea.sflag [#allocation2], 4
        // Predicated region
        $region29: #{tpu_custom_call.1} parent=11 // pred_check
          _
        $region30: #{tpu_custom_call.1} parent=11 // pred_check_branch
          %145 = sbr.rel target = $region32
        $region31: #{tpu_custom_call.1} parent=11 // pred_region
          %146 = sst [smem:[#allocation9]] [#allocation18]
          %147 = sst [smem:[#allocation10]] [#allocation17]
        $region32: #{tpu_custom_call.1} parent=11 // pred_fallthru
          _
        %149 = shalt.err (0)
        %s151 = sshll.u32 %s142, 4
        %s152 = int_to_ptr.vmem [resolvable:$true] %s151
        %154 = dma.hbm_to_vmem [thread:$0]  %s141, 16, %s152, %s143
        %s155 = sadd.s32 %s52, 5
        %s156 = sld [smem:[#allocation4 + %s155]]
        %p157 = scmp.gt.s32.totalorder %s156, 0
        %s158 = scalar_select %p157, %s156, 0
        %p159 = scmp.lt.s32.totalorder %s158, 63
        %s160 = scalar_select %p159, %s158, 63
        %s161 = smul.addr %s160, 16
        %s162 = scalar_lea.hbm %s1, %s161
        %s163 = scalar_lea.vmem %s51, 5 [#allocation5]
        %s164 = scalar_lea.sflag [#allocation2], 5
        // Predicated region
        $region33: #{tpu_custom_call.1} parent=11 // pred_check
          _
        $region34: #{tpu_custom_call.1} parent=11 // pred_check_branch
          %166 = sbr.rel target = $region36
        $region35: #{tpu_custom_call.1} parent=11 // pred_region
          %167 = sst [smem:[#allocation9]] [#allocation20]
          %168 = sst [smem:[#allocation10]] [#allocation19]
        $region36: #{tpu_custom_call.1} parent=11 // pred_fallthru
          _
        %170 = shalt.err (0)
        %s172 = sshll.u32 %s163, 4
        %s173 = int_to_ptr.vmem [resolvable:$true] %s172
        %175 = dma.hbm_to_vmem [thread:$0]  %s162, 16, %s173, %s164
        %s176 = sadd.s32 %s52, 6
        %s177 = sld [smem:[#allocation4 + %s176]]
        %p178 = scmp.gt.s32.totalorder %s177, 0
        %s179 = scalar_select %p178, %s177, 0
        %p180 = scmp.lt.s32.totalorder %s179, 63
        %s181 = scalar_select %p180, %s179, 63
        %s182 = smul.addr %s181, 16
        %s183 = scalar_lea.hbm %s1, %s182
        %s184 = scalar_lea.vmem %s51, 6 [#allocation5]
        %s185 = scalar_lea.sflag [#allocation2], 6
        // Predicated region
        $region37: #{tpu_custom_call.1} parent=11 // pred_check
          _
        $region38: #{tpu_custom_call.1} parent=11 // pred_check_branch
          %187 = sbr.rel target = $region40
        $region39: #{tpu_custom_call.1} parent=11 // pred_region
          %188 = sst [smem:[#allocation9]] [#allocation22]
          %189 = sst [smem:[#allocation10]] [#allocation21]
        $region40: #{tpu_custom_call.1} parent=11 // pred_fallthru
          _
        %191 = shalt.err (0)
        %s193 = sshll.u32 %s184, 4
        %s194 = int_to_ptr.vmem [resolvable:$true] %s193
        %196 = dma.hbm_to_vmem [thread:$0]  %s183, 16, %s194, %s185
        %s197 = sadd.s32 %s52, 7
        %s198 = sld [smem:[#allocation4 + %s197]]
        %p199 = scmp.gt.s32.totalorder %s198, 0
        %s200 = scalar_select %p199, %s198, 0
        %p201 = scmp.lt.s32.totalorder %s200, 63
        %s202 = scalar_select %p201, %s200, 63
        %s203 = smul.addr %s202, 16
        %s204 = scalar_lea.hbm %s1, %s203
        %s205 = scalar_lea.vmem %s51, 7 [#allocation5]
        %s206 = scalar_lea.sflag [#allocation2], 7
        // Predicated region
        $region41: #{tpu_custom_call.1} parent=11 // pred_check
          _
        $region42: #{tpu_custom_call.1} parent=11 // pred_check_branch
          %208 = sbr.rel target = $region44
        $region43: #{tpu_custom_call.1} parent=11 // pred_region
          %209 = sst [smem:[#allocation9]] [#allocation24]
          %210 = sst [smem:[#allocation10]] [#allocation23]
        $region44: #{tpu_custom_call.1} parent=11 // pred_fallthru
          _
        %212 = shalt.err (0)
        %s214 = sshll.u32 %s205, 4
        %s215 = int_to_ptr.vmem [resolvable:$true] %s214
        %217 = dma.hbm_to_vmem [thread:$0]  %s204, 16, %s215, %s206
        %219 = dma.done [#allocation2], 16
        %221 = dma.done %s80, 16
        %223 = dma.done %s101, 16
        %225 = dma.done %s122, 16
        %227 = dma.done %s143, 16
        %229 = dma.done %s164, 16
        %231 = dma.done %s185, 16
        %233 = dma.done %s206, 16
        %s234 = sand.u32 %s24, 1
        %s235 = scalar_lea.sflag [#allocation6], %s234
        %s236 = sand.u32 %s24, 1
        %s237 = smul.addr %s236, 8
        %s238 = scalar_lea.vmem [#allocation5], %s237
        // Predicated region
        $region45: #{tpu_custom_call.1} parent=11 // pred_check
          %p239 = pneg %p30
        $region46: #{tpu_custom_call.1} parent=11 // pred_check_branch
          %241 = sbr.rel (%p239) target = $region48
        $region47: #{tpu_custom_call.1} parent=11 // pred_region
          %s243 = ssub.s32 128, 128
          %244 = vsyncadd %s235, %s243
          %s245 = smul.addr %s15, 128
          %s246 = scalar_lea.hbm %s2, %s245
          %s248 = sshll.u32 %s238, 4
          %s249 = int_to_ptr.vmem [resolvable:$true] %s248
          %251 = dma.vmem_to_hbm [thread:$0]  %s249, 128, %s246, %s235
        $region48: #{tpu_custom_call.1} parent=11 // pred_fallthru
          _
      $region12: #{tpu_custom_call.1} parent=5 // pred_fallthru
        _
      %p252 = scmp.le.s32.totalorder 1, %s15
      // Predicated region
      $region49: #{tpu_custom_call.1} parent=5 // pred_check
        %p253 = pneg %p252
      $region50: #{tpu_custom_call.1} parent=5 // pred_check_branch
        %255 = sbr.rel (%p253) target = $region52
      $region51: #{tpu_custom_call.1} parent=5 // pred_region
        %s256 = ssub.s32 %s15, 1
        // Predicated region
        $region53: #{tpu_custom_call.1} parent=51 // pred_check
          %p257 = pneg %p36
        $region54: #{tpu_custom_call.1} parent=51 // pred_check_branch
          %259 = sbr.rel (%p257) target = $region56
        $region55: #{tpu_custom_call.1} parent=51 // pred_region
          %s260 = sand.u32 %s27, 1
          %s261 = scalar_lea.sflag [#allocation6], %s260
          %s262 = sand.u32 %s27, 1
          %s263 = smul.addr %s262, 8
          %s264 = scalar_lea.vmem [#allocation5], %s263
          %265 = dma.done %s261, 128
        $region56: #{tpu_custom_call.1} parent=51 // pred_fallthru
          _
      $region52: #{tpu_custom_call.1} parent=5 // pred_fallthru
        _
    $region6: #{tpu_custom_call.1} parent=1 // loop_footer
      %s19 = sadd.s32 1, %s15
    $region7: #{tpu_custom_call.1} parent=1 // loop_footer_branch
      %14 = sbr.rel target = $region3
    $region8: #{tpu_custom_call.1} parent=1 // loop_exit
      _
    %266 = vsyncpa [#allocation6], 1
    %s267 = scalar_lea.sflag [#allocation6], 1
    %268 = vsyncpa %s267, 1
  %269 = vsyncmov [#allocation2]
  %s270 = vpop.sfrf %269
  %p271 = scmp.eq.s32.totalorder %s270, 0
  %p272 = pneg %p271
  %274 = shalt.err (%p272)
  %s275 = scalar_lea.sflag [#allocation2], 1
  %276 = vsyncmov %s275
  %s277 = vpop.sfrf %276
  %p278 = scmp.eq.s32.totalorder %s277, 0
  %p279 = pneg %p278
  %281 = shalt.err (%p279)
  %s282 = scalar_lea.sflag [#allocation2], 2
  %283 = vsyncmov %s282
  %s284 = vpop.sfrf %283
  %p285 = scmp.eq.s32.totalorder %s284, 0
  %p286 = pneg %p285
  %288 = shalt.err (%p286)
  %s289 = scalar_lea.sflag [#allocation2], 3
  %290 = vsyncmov %s289
  %s291 = vpop.sfrf %290
  %p292 = scmp.eq.s32.totalorder %s291, 0
  %p293 = pneg %p292
  %295 = shalt.err (%p293)
  %s296 = scalar_lea.sflag [#allocation2], 4
  %297 = vsyncmov %s296
  %s298 = vpop.sfrf %297
  %p299 = scmp.eq.s32.totalorder %s298, 0
  %p300 = pneg %p299
  %302 = shalt.err (%p300)
  %s303 = scalar_lea.sflag [#allocation2], 5
  %304 = vsyncmov %s303
  %s305 = vpop.sfrf %304
  %p306 = scmp.eq.s32.totalorder %s305, 0
  %p307 = pneg %p306
  %309 = shalt.err (%p307)
  %s310 = scalar_lea.sflag [#allocation2], 6
  %311 = vsyncmov %s310
  %s312 = vpop.sfrf %311
  %p313 = scmp.eq.s32.totalorder %s312, 0
  %p314 = pneg %p313
  %316 = shalt.err (%p314)
  %s317 = scalar_lea.sflag [#allocation2], 7
  %318 = vsyncmov %s317
  %s319 = vpop.sfrf %318
  %p320 = scmp.eq.s32.totalorder %s319, 0
  %p321 = pneg %p320
  %323 = shalt.err (%p321)

</llo_original>
